<compile_context>
chip_gen: v7x
topology: tpu7x:2x2x1
jax: 0.10.0
libtpu: 0.0.40
codegen_flags: <defaults>
</compile_context>

<pallas_src>
import functools

import jax
import jax.numpy as jnp
from jax.experimental import pallas as pl
from jax.experimental.pallas import tpu as pltpu


# ----------------------------------------------------------------------------
# Fused kernel: all QRNN layers + dense head in one invocation.
# ----------------------------------------------------------------------------
def _make_fused_kernel(num_layers, n_filters):
    F = n_filters

    def kernel(x_ref, shift_ref, gsum_ref, dw_ref, db_ref, *rest):
        # x_ref     : (B*S, E)    embedded tokens, batch folded into rows
        # shift_ref : (B*S, B*S)  banded matrix: row i selects row i-1, zeroed
        #                         at batch starts (per-batch causal shift)
        # gsum_ref  : (B, B*S)    batch group-sum matrix for the dense head
        # dw_ref    : (B*S, F)    dense weight reshaped to (S, F), tiled B times
        # db_ref    : (1, 1)      dense bias
        # rest      : per layer (w_prev (D,3F), w_cur (D,3F), bias (1,3F)),
        #             followed by the single output ref (B, 1).
        out_ref = rest[-1]
        layer_refs = rest[:-1]

        shift = shift_ref[...]
        h = x_ref[...]
        c = None
        for l in range(num_layers):
            wp = layer_refs[3 * l][...]
            wc = layer_refs[3 * l + 1][...]
            b = layer_refs[3 * l + 2][...]
            # one-step causal shift of this layer's input (stays on-chip)
            h_shift = jnp.dot(shift, h, preferred_element_type=jnp.float32)
            # all three gates from one packed matmul pair -> (B*S, 3F)
            pre = (jnp.dot(h_shift, wp, preferred_element_type=jnp.float32)
                   + jnp.dot(h, wc, preferred_element_type=jnp.float32)
                   + b)
            z = jnp.tanh(pre[:, :F])
            f = jax.nn.sigmoid(pre[:, F:2 * F])
            o = jax.nn.sigmoid(pre[:, 2 * F:])
            one_minus_f = 1.0 - f
            # fo-pool against previous LAYER's cell state (zeros for layer 0)
            c = one_minus_f * z if l == 0 else f * c + one_minus_f * z
            h = o * c

        # dense head: logit[b] = sum_{s,f} h[b*S+s, f] * W[s, f] + bias
        p = h * dw_ref[...]                                         # VPU
        g = jnp.dot(gsum_ref[...], p,
                    preferred_element_type=jnp.float32)             # (B, F)
        logits = jnp.sum(g, axis=1, keepdims=True) + db_ref[...]    # (B, 1)
        out_ref[...] = jax.nn.sigmoid(logits)

    return kernel


# ----------------------------------------------------------------------------
# Wrapper: embedding gather (plain-JAX glue) + single pallas_call.
# ----------------------------------------------------------------------------
def qrnn_forward(params, token_ids, batch_size, seq_len, n_filters):
    B, S, F = batch_size, seq_len, n_filters
    num_layers = len(params["layers"])

    x = params["embedding"][token_ids].astype(jnp.float32)          # [B, S, E]
    E = x.shape[-1]
    BS = B * S
    x_flat = x.reshape(BS, E)

    # Tiny constant helper matrices (exact 0/1 values -> MXU shift is exact).
    r = jnp.arange(BS)
    shift_mat = ((r[:, None] == r[None, :] + 1)
                 & ((r[:, None] % S) != 0)).astype(jnp.float32)     # [BS, BS]
    group_mat = ((r[None, :] // S)
                 == jnp.arange(B)[:, None]).astype(jnp.float32)     # [B, BS]
    dense_w_tiled = jnp.tile(params["dense_w"].reshape(S, F), (B, 1))
    dense_b = params["dense_b"].reshape(1, 1)

    inputs = [x_flat, shift_mat, group_mat, dense_w_tiled, dense_b]
    in_specs = [
        pl.BlockSpec((BS, E), lambda i: (0, 0)),
        pl.BlockSpec((BS, BS), lambda i: (0, 0)),
        pl.BlockSpec((B, BS), lambda i: (0, 0)),
        pl.BlockSpec((BS, F), lambda i: (0, 0)),
        pl.BlockSpec((1, 1), lambda i: (0, 0)),
    ]

    flops = 0
    for lp in params["layers"]:
        D = lp["w_cur"].shape[1]
        # pack the 3 gates: (3, D, F) -> (D, 3F)
        w_prev = jnp.transpose(lp["w_prev"], (1, 0, 2)).reshape(D, 3 * F)
        w_cur = jnp.transpose(lp["w_cur"], (1, 0, 2)).reshape(D, 3 * F)
        bias = lp["bias"].reshape(1, 3 * F)
        inputs += [w_prev, w_cur, bias]
        in_specs += [
            pl.BlockSpec((D, 3 * F), lambda i: (0, 0)),
            pl.BlockSpec((D, 3 * F), lambda i: (0, 0)),
            pl.BlockSpec((1, 3 * F), lambda i: (0, 0)),
        ]
        flops += 2 * BS * BS * D + 2 * (2 * BS * D * 3 * F) + 7 * BS * F
    flops += 2 * BS * F + 2 * B * BS * F + B * F + 2 * B
    transcendentals = num_layers * 3 * BS * F + B
    bytes_accessed = sum(int(a.size) * 4 for a in inputs) + B * 4

    kernel = _make_fused_kernel(num_layers, F)
    return pl.pallas_call(
        kernel,
        out_shape=jax.ShapeDtypeStruct((B, 1), jnp.float32),
        grid=(1,),
        in_specs=in_specs,
        out_specs=pl.BlockSpec((B, 1), lambda i: (0, 0)),
        compiler_params=pltpu.CompilerParams(
            dimension_semantics=("arbitrary",),
            vmem_limit_bytes=16 * 1024 * 1024),
        cost_estimate=pl.CostEstimate(
            flops=int(flops),
            transcendentals=int(transcendentals),
            bytes_accessed=int(bytes_accessed)),
    )(*inputs)


# ----------------------------------------------------------------------------
# Pure-JAX reference (mirrors the PyTorch module) for a correctness check.
# ----------------------------------------------------------------------------
def ref_layer(x, c_prev, w_cur, w_prev, bias):
    B, S, D = x.shape
    x_pad = jnp.concatenate([jnp.zeros((B, 1, D), x.dtype), x], axis=1)
    pre = (jnp.einsum("bsd,gdf->gbsf", x_pad[:, :-1], w_prev)
           + jnp.einsum("bsd,gdf->gbsf", x_pad[:, 1:], w_cur)
           + bias[:, None, None, :])
    z = jnp.tanh(pre[0])
    f = jax.nn.sigmoid(pre[1])
    o = jax.nn.sigmoid(pre[2])
    c = f * c_prev + (1.0 - f) * z
    return o * c, c


def ref_forward(params, token_ids, batch_size, seq_len, n_filters):
    x = params["embedding"][token_ids]
    c = jnp.zeros((batch_size, seq_len, n_filters), jnp.float32)
    masked_input = x
    for layer_p in params["layers"]:
        h, c = ref_layer(masked_input, c, layer_p["w_cur"],
                         layer_p["w_prev"], layer_p["bias"])
        masked_input = h
    logits = (masked_input.reshape(batch_size, -1) @ params["dense_w"]
              + params["dense_b"])
    return jax.nn.sigmoid(logits)


# ----------------------------------------------------------------------------
def init_params(key, vocab_size, embed_size, n_filters, seq_len, layers):
    keys = jax.random.split(key, 2 + 3 * layers)
    params = {"embedding": jax.random.normal(keys[0],
                                             (vocab_size, embed_size),
                                             jnp.float32)}
    layer_params = []
    for l in range(layers):
        d_in = embed_size if l == 0 else n_filters
        bound = 1.0 / jnp.sqrt(jnp.float32(d_in * 2))  # kernel_size = 2
        kw, kp, kb = jax.random.split(keys[2 + 3 * l], 3)
        layer_params.append({
            "w_cur": jax.random.uniform(kw, (3, d_in, n_filters), jnp.float32,
                                        -bound, bound),
            "w_prev": jax.random.uniform(kp, (3, d_in, n_filters), jnp.float32,
                                         -bound, bound),
            "bias": jax.random.uniform(kb, (3, n_filters), jnp.float32,
                                       -bound, bound),
        })
    params["layers"] = layer_params
    kd, kdb = jax.random.split(keys[1])
    dbound = 1.0 / jnp.sqrt(jnp.float32(seq_len * n_filters))
    params["dense_w"] = jax.random.uniform(kd, (seq_len * n_filters, 1),
                                           jnp.float32, -dbound, dbound)
    params["dense_b"] = jax.random.uniform(kdb, (1, 1), jnp.float32,
                                           -dbound, dbound)
    return params


if __name__ == "__main__":
    # Module hyper-params (kernel_size=2 is what makes the 1-step-shift conv
    # exact, as in the PyTorch module; dropout=0 -> eval-mode identity).
    vocab_size, embed_size, n_filters = 50, 32, 32
    batch_size, seq_len, num_layers = 2, 8, 2

    key = jax.random.PRNGKey(0)
    k_param, k_tok = jax.random.split(key)
    params = init_params(k_param, vocab_size, embed_size, n_filters,
                         seq_len, num_layers)
    token_ids = jax.random.randint(k_tok, (batch_size, seq_len), 0, vocab_size)

    fwd = functools.partial(qrnn_forward, batch_size=batch_size,
                            seq_len=seq_len, n_filters=n_filters)
    pred = jax.jit(fwd)(params, token_ids)
    pred = jax.block_until_ready(pred)

    ref = ref_forward(params, token_ids, batch_size, seq_len, n_filters)
    assert pred.shape == (batch_size, 1)
    assert jnp.allclose(pred, ref, atol=1e-5, rtol=1e-5)

    print("KERNEL_OK")
</pallas_src>

<mosaic_0001>
module attributes {stable_mosaic.version = 11 : i64} {
  func.func @kernel(%arg0: i32, %arg1: memref<16x32xf32, #tpu.memory_space<vmem>>, %arg2: memref<16x16xf32, #tpu.memory_space<vmem>>, %arg3: memref<2x16xf32, #tpu.memory_space<vmem>>, %arg4: memref<16x32xf32, #tpu.memory_space<vmem>>, %arg5: memref<1x1xf32, #tpu.memory_space<vmem>>, %arg6: memref<32x96xf32, #tpu.memory_space<vmem>>, %arg7: memref<32x96xf32, #tpu.memory_space<vmem>>, %arg8: memref<1x96xf32, #tpu.memory_space<vmem>>, %arg9: memref<32x96xf32, #tpu.memory_space<vmem>>, %arg10: memref<32x96xf32, #tpu.memory_space<vmem>>, %arg11: memref<1x96xf32, #tpu.memory_space<vmem>>, %arg12: memref<2x1xf32, #tpu.memory_space<vmem>>) attributes {dimension_semantics = [#tpu.dimension_semantics<arbitrary>], iteration_bounds = array<i64: 1>, scalar_prefetch = 0 : i64, scratch_operands = 0 : i64, tpu.core_type = #tpu.core_type<tc>, window_params = [{pipeline_mode = #tpu.pipeline_mode<synchronous>, transform_indices = @transform_0, window_bounds = array<i64: 16, 32>}, {pipeline_mode = #tpu.pipeline_mode<synchronous>, transform_indices = @transform_1, window_bounds = array<i64: 16, 16>}, {pipeline_mode = #tpu.pipeline_mode<synchronous>, transform_indices = @transform_2, window_bounds = array<i64: 2, 16>}, {pipeline_mode = #tpu.pipeline_mode<synchronous>, transform_indices = @transform_3, window_bounds = array<i64: 16, 32>}, {pipeline_mode = #tpu.pipeline_mode<synchronous>, transform_indices = @transform_4, window_bounds = array<i64: 1, 1>}, {pipeline_mode = #tpu.pipeline_mode<synchronous>, transform_indices = @transform_5, window_bounds = array<i64: 32, 96>}, {pipeline_mode = #tpu.pipeline_mode<synchronous>, transform_indices = @transform_6, window_bounds = array<i64: 32, 96>}, {pipeline_mode = #tpu.pipeline_mode<synchronous>, transform_indices = @transform_7, window_bounds = array<i64: 1, 96>}, {pipeline_mode = #tpu.pipeline_mode<synchronous>, transform_indices = @transform_8, window_bounds = array<i64: 32, 96>}, {pipeline_mode = #tpu.pipeline_mode<synchronous>, transform_indices = @transform_9, window_bounds = array<i64: 32, 96>}, {pipeline_mode = #tpu.pipeline_mode<synchronous>, transform_indices = @transform_10, window_bounds = array<i64: 1, 96>}, {pipeline_mode = #tpu.pipeline_mode<synchronous>, transform_indices = @transform_11, window_bounds = array<i64: 2, 1>}]} {
    %c0 = arith.constant 0 : index
    %c0_0 = arith.constant 0 : index
    %0 = vector.load %arg2[%c0, %c0_0] : memref<16x16xf32, #tpu.memory_space<vmem>>, vector<16x16xf32>
    %c0_1 = arith.constant 0 : index
    %c0_2 = arith.constant 0 : index
    %1 = vector.load %arg1[%c0_1, %c0_2] : memref<16x32xf32, #tpu.memory_space<vmem>>, vector<16x32xf32>
    %c0_3 = arith.constant 0 : index
    %c0_4 = arith.constant 0 : index
    %2 = vector.load %arg6[%c0_3, %c0_4] : memref<32x96xf32, #tpu.memory_space<vmem>>, vector<32x96xf32>
    %c0_5 = arith.constant 0 : index
    %c0_6 = arith.constant 0 : index
    %3 = vector.load %arg7[%c0_5, %c0_6] : memref<32x96xf32, #tpu.memory_space<vmem>>, vector<32x96xf32>
    %c0_7 = arith.constant 0 : index
    %c0_8 = arith.constant 0 : index
    %4 = vector.load %arg8[%c0_7, %c0_8] : memref<1x96xf32, #tpu.memory_space<vmem>>, vector<1x96xf32>
    %cst = arith.constant dense<0.000000e+00> : vector<16x32xf32>
    %5 = tpu.matmul %0, %1, %cst {dimension_numbers = #tpu.dot_dimension_numbers<[1], [0], [0], [1], [0, 0, 1, 1], [], []>} : vector<16x16xf32>, vector<16x32xf32>, vector<16x32xf32> -> vector<16x32xf32>
    %cst_9 = arith.constant dense<0.000000e+00> : vector<16x96xf32>
    %6 = tpu.matmul %5, %2, %cst_9 {dimension_numbers = #tpu.dot_dimension_numbers<[1], [0], [0], [1], [0, 0, 1, 1], [], []>} : vector<16x32xf32>, vector<32x96xf32>, vector<16x96xf32> -> vector<16x96xf32>
    %cst_10 = arith.constant dense<0.000000e+00> : vector<16x96xf32>
    %7 = tpu.matmul %1, %3, %cst_10 {dimension_numbers = #tpu.dot_dimension_numbers<[1], [0], [0], [1], [0, 0, 1, 1], [], []>} : vector<16x32xf32>, vector<32x96xf32>, vector<16x96xf32> -> vector<16x96xf32>
    %8 = arith.addf %6, %7 : vector<16x96xf32>
    %9 = vector.broadcast %4 : vector<1x96xf32> to vector<16x96xf32>
    %10 = arith.addf %8, %9 : vector<16x96xf32>
    %11 = vector.extract_strided_slice %10 {offsets = [0, 0], sizes = [16, 32], strides = [1, 1]} : vector<16x96xf32> to vector<16x32xf32>
    %12 = math.tanh %11 : vector<16x32xf32>
    %13 = vector.extract_strided_slice %10 {offsets = [0, 32], sizes = [16, 32], strides = [1, 1]} : vector<16x96xf32> to vector<16x32xf32>
    %14 = arith.negf %13 : vector<16x32xf32>
    %15 = math.exp %14 : vector<16x32xf32>
    %cst_11 = arith.constant 1.000000e+00 : f32
    %16 = vector.broadcast %cst_11 : f32 to vector<16x32xf32>
    %17 = arith.addf %16, %15 : vector<16x32xf32>
    %18 = arith.divf %16, %17 : vector<16x32xf32>
    %19 = vector.extract_strided_slice %10 {offsets = [0, 64], sizes = [16, 32], strides = [1, 1]} : vector<16x96xf32> to vector<16x32xf32>
    %20 = arith.negf %19 : vector<16x32xf32>
    %21 = math.exp %20 : vector<16x32xf32>
    %cst_12 = arith.constant 1.000000e+00 : f32
    %22 = vector.broadcast %cst_12 : f32 to vector<16x32xf32>
    %23 = arith.addf %22, %21 : vector<16x32xf32>
    %24 = arith.divf %22, %23 : vector<16x32xf32>
    %cst_13 = arith.constant 1.000000e+00 : f32
    %25 = vector.broadcast %cst_13 : f32 to vector<16x32xf32>
    %26 = arith.subf %25, %18 : vector<16x32xf32>
    %27 = arith.mulf %26, %12 : vector<16x32xf32>
    %28 = arith.mulf %24, %27 : vector<16x32xf32>
    %c0_14 = arith.constant 0 : index
    %c0_15 = arith.constant 0 : index
    %29 = vector.load %arg9[%c0_14, %c0_15] : memref<32x96xf32, #tpu.memory_space<vmem>>, vector<32x96xf32>
    %c0_16 = arith.constant 0 : index
    %c0_17 = arith.constant 0 : index
    %30 = vector.load %arg10[%c0_16, %c0_17] : memref<32x96xf32, #tpu.memory_space<vmem>>, vector<32x96xf32>
    %c0_18 = arith.constant 0 : index
    %c0_19 = arith.constant 0 : index
    %31 = vector.load %arg11[%c0_18, %c0_19] : memref<1x96xf32, #tpu.memory_space<vmem>>, vector<1x96xf32>
    %cst_20 = arith.constant dense<0.000000e+00> : vector<16x32xf32>
    %32 = tpu.matmul %0, %28, %cst_20 {dimension_numbers = #tpu.dot_dimension_numbers<[1], [0], [0], [1], [0, 0, 1, 1], [], []>} : vector<16x16xf32>, vector<16x32xf32>, vector<16x32xf32> -> vector<16x32xf32>
    %cst_21 = arith.constant dense<0.000000e+00> : vector<16x96xf32>
    %33 = tpu.matmul %32, %29, %cst_21 {dimension_numbers = #tpu.dot_dimension_numbers<[1], [0], [0], [1], [0, 0, 1, 1], [], []>} : vector<16x32xf32>, vector<32x96xf32>, vector<16x96xf32> -> vector<16x96xf32>
    %cst_22 = arith.constant dense<0.000000e+00> : vector<16x96xf32>
    %34 = tpu.matmul %28, %30, %cst_22 {dimension_numbers = #tpu.dot_dimension_numbers<[1], [0], [0], [1], [0, 0, 1, 1], [], []>} : vector<16x32xf32>, vector<32x96xf32>, vector<16x96xf32> -> vector<16x96xf32>
    %35 = arith.addf %33, %34 : vector<16x96xf32>
    %36 = vector.broadcast %31 : vector<1x96xf32> to vector<16x96xf32>
    %37 = arith.addf %35, %36 : vector<16x96xf32>
    %38 = vector.extract_strided_slice %37 {offsets = [0, 0], sizes = [16, 32], strides = [1, 1]} : vector<16x96xf32> to vector<16x32xf32>
    %39 = math.tanh %38 : vector<16x32xf32>
    %40 = vector.extract_strided_slice %37 {offsets = [0, 32], sizes = [16, 32], strides = [1, 1]} : vector<16x96xf32> to vector<16x32xf32>
    %41 = arith.negf %40 : vector<16x32xf32>
    %42 = math.exp %41 : vector<16x32xf32>
    %cst_23 = arith.constant 1.000000e+00 : f32
    %43 = vector.broadcast %cst_23 : f32 to vector<16x32xf32>
    %44 = arith.addf %43, %42 : vector<16x32xf32>
    %45 = arith.divf %43, %44 : vector<16x32xf32>
    %46 = vector.extract_strided_slice %37 {offsets = [0, 64], sizes = [16, 32], strides = [1, 1]} : vector<16x96xf32> to vector<16x32xf32>
    %47 = arith.negf %46 : vector<16x32xf32>
    %48 = math.exp %47 : vector<16x32xf32>
    %cst_24 = arith.constant 1.000000e+00 : f32
    %49 = vector.broadcast %cst_24 : f32 to vector<16x32xf32>
    %50 = arith.addf %49, %48 : vector<16x32xf32>
    %51 = arith.divf %49, %50 : vector<16x32xf32>
    %cst_25 = arith.constant 1.000000e+00 : f32
    %52 = vector.broadcast %cst_25 : f32 to vector<16x32xf32>
    %53 = arith.subf %52, %45 : vector<16x32xf32>
    %54 = arith.mulf %45, %27 : vector<16x32xf32>
    %55 = arith.mulf %53, %39 : vector<16x32xf32>
    %56 = arith.addf %54, %55 : vector<16x32xf32>
    %57 = arith.mulf %51, %56 : vector<16x32xf32>
    %c0_26 = arith.constant 0 : index
    %c0_27 = arith.constant 0 : index
    %58 = vector.load %arg4[%c0_26, %c0_27] : memref<16x32xf32, #tpu.memory_space<vmem>>, vector<16x32xf32>
    %59 = arith.mulf %57, %58 : vector<16x32xf32>
    %c0_28 = arith.constant 0 : index
    %c0_29 = arith.constant 0 : index
    %60 = vector.load %arg3[%c0_28, %c0_29] : memref<2x16xf32, #tpu.memory_space<vmem>>, vector<2x16xf32>
    %cst_30 = arith.constant dense<0.000000e+00> : vector<2x32xf32>
    %61 = tpu.matmul %60, %59, %cst_30 {dimension_numbers = #tpu.dot_dimension_numbers<[1], [0], [0], [1], [0, 0, 1, 1], [], []>} : vector<2x16xf32>, vector<16x32xf32>, vector<2x32xf32> -> vector<2x32xf32>
    %cst_31 = arith.constant dense<0.000000e+00> : vector<2xf32>
    %62 = vector.multi_reduction <add>, %61, %cst_31 [1] : vector<2x32xf32> to vector<2xf32>
    %63 = vector.shape_cast %62 : vector<2xf32> to vector<2x1xf32>
    %c0_32 = arith.constant 0 : index
    %c0_33 = arith.constant 0 : index
    %64 = vector.load %arg5[%c0_32, %c0_33] : memref<1x1xf32, #tpu.memory_space<vmem>>, vector<1x1xf32>
    %65 = vector.broadcast %64 : vector<1x1xf32> to vector<2x1xf32>
    %66 = arith.addf %63, %65 : vector<2x1xf32>
    %67 = arith.negf %66 : vector<2x1xf32>
    %68 = math.exp %67 : vector<2x1xf32>
    %cst_34 = arith.constant 1.000000e+00 : f32
    %69 = vector.broadcast %cst_34 : f32 to vector<2x1xf32>
    %70 = arith.addf %69, %68 : vector<2x1xf32>
    %71 = arith.divf %69, %70 : vector<2x1xf32>
    %c0_35 = arith.constant 0 : index
    %c0_36 = arith.constant 0 : index
    %72 = vector.load %arg12[%c0_35, %c0_36] : memref<2x1xf32, #tpu.memory_space<vmem>>, vector<2x1xf32>
    tpu.vector_store %arg12[%c0_35, %c0_36], %71 {strides = array<i32>} : memref<2x1xf32, #tpu.memory_space<vmem>>, vector<2x1xf32>,
    return
  }
  func.func @transform_0(%arg0: i32) -> (i32, i32) {
    %c0_i32 = arith.constant 0 : i32
    %c0_i32_0 = arith.constant 0 : i32
    %c0_i32_1 = arith.constant 0 : i32
    return %c0_i32, %c0_i32_0 : i32, i32
  }
  func.func @transform_1(%arg0: i32) -> (i32, i32) {
    %c0_i32 = arith.constant 0 : i32
    %c0_i32_0 = arith.constant 0 : i32
    %c0_i32_1 = arith.constant 0 : i32
    return %c0_i32, %c0_i32_0 : i32, i32
  }
  func.func @transform_2(%arg0: i32) -> (i32, i32) {
    %c0_i32 = arith.constant 0 : i32
    %c0_i32_0 = arith.constant 0 : i32
    %c0_i32_1 = arith.constant 0 : i32
    return %c0_i32, %c0_i32_0 : i32, i32
  }
  func.func @transform_3(%arg0: i32) -> (i32, i32) {
    %c0_i32 = arith.constant 0 : i32
    %c0_i32_0 = arith.constant 0 : i32
    %c0_i32_1 = arith.constant 0 : i32
    return %c0_i32, %c0_i32_0 : i32, i32
  }
  func.func @transform_4(%arg0: i32) -> (i32, i32) {
    %c0_i32 = arith.constant 0 : i32
    %c0_i32_0 = arith.constant 0 : i32
    %c0_i32_1 = arith.constant 0 : i32
    return %c0_i32, %c0_i32_0 : i32, i32
  }
  func.func @transform_5(%arg0: i32) -> (i32, i32) {
    %c0_i32 = arith.constant 0 : i32
    %c0_i32_0 = arith.constant 0 : i32
    %c0_i32_1 = arith.constant 0 : i32
    return %c0_i32, %c0_i32_0 : i32, i32
  }
  func.func @transform_6(%arg0: i32) -> (i32, i32) {
    %c0_i32 = arith.constant 0 : i32
    %c0_i32_0 = arith.constant 0 : i32
    %c0_i32_1 = arith.constant 0 : i32
    return %c0_i32, %c0_i32_0 : i32, i32
  }
  func.func @transform_7(%arg0: i32) -> (i32, i32) {
    %c0_i32 = arith.constant 0 : i32
    %c0_i32_0 = arith.constant 0 : i32
    %c0_i32_1 = arith.constant 0 : i32
    return %c0_i32, %c0_i32_0 : i32, i32
  }
  func.func @transform_8(%arg0: i32) -> (i32, i32) {
    %c0_i32 = arith.constant 0 : i32
    %c0_i32_0 = arith.constant 0 : i32
    %c0_i32_1 = arith.constant 0 : i32
    return %c0_i32, %c0_i32_0 : i32, i32
  }
  func.func @transform_9(%arg0: i32) -> (i32, i32) {
    %c0_i32 = arith.constant 0 : i32
    %c0_i32_0 = arith.constant 0 : i32
    %c0_i32_1 = arith.constant 0 : i32
    return %c0_i32, %c0_i32_0 : i32, i32
  }
  func.func @transform_10(%arg0: i32) -> (i32, i32) {
    %c0_i32 = arith.constant 0 : i32
    %c0_i32_0 = arith.constant 0 : i32
    %c0_i32_1 = arith.constant 0 : i32
    return %c0_i32, %c0_i32_0 : i32, i32
  }
  func.func @transform_11(%arg0: i32) -> (i32, i32) {
    %c0_i32 = arith.constant 0 : i32
    %c0_i32_0 = arith.constant 0 : i32
    %c0_i32_1 = arith.constant 0 : i32
    return %c0_i32, %c0_i32_0 : i32, i32
  }
}

</mosaic_0001>

<llo_original>
// kernel: qrnn_forward.1
$region0: #{qrnn_forward.1}
  #allocation0 [shape = 'u32[]', space=smem, size = 0x4, offset = 0x4, fixed_abs, tag = 'smem constant byte address 0x4 - core index']
  #allocation1 [shape = 'u32[144,128]{1,0:T(1,128)}', space=vmem, size = 0x12000, scoped, tag = 'internal scratch']
  #allocation2 [shape = 'f32[1,1]{1,0:T(1,128)S(1)}', space=vmem, size = 0x200, scoped, tag = 'scoped memory for qrnn_forward.1']
  %s0 = inlined_call_operand.vmem [shape: f32[16,32], index: 0, kind: input, shape index: {}]
  %s1 = inlined_call_operand.vmem [shape: f32[16,16], index: 1, kind: input, shape index: {}]
  %s2 = inlined_call_operand.vmem [shape: f32[2,16], index: 2, kind: input, shape index: {}]
  %s3 = inlined_call_operand.vmem [shape: f32[16,32], index: 3, kind: input, shape index: {}]
  %s4 = inlined_call_operand.<no memory space> [shape: f32[1,1], index: 4, kind: input, shape index: {}]
  %s5 = inlined_call_operand.vmem [shape: f32[32,96], index: 5, kind: input, shape index: {}]
  %s6 = inlined_call_operand.vmem [shape: f32[32,96], index: 6, kind: input, shape index: {}]
  %s7 = inlined_call_operand.vmem [shape: f32[1,96], index: 7, kind: input, shape index: {}]
  %s8 = inlined_call_operand.vmem [shape: f32[32,96], index: 8, kind: input, shape index: {}]
  %s9 = inlined_call_operand.vmem [shape: f32[32,96], index: 9, kind: input, shape index: {}]
  %s10 = inlined_call_operand.vmem [shape: f32[1,96], index: 10, kind: input, shape index: {}]
  %s11 = inlined_call_operand.vmem [shape: f32[2,1], index: 11, kind: output, shape index: {}]
  %s12 = sld [smem:[#allocation0]]
  $region54: #{qrnn_forward.1} parent=0
    _
  %s14 = ssub.s32 1, %s12
  %s15 = scalar_select 0, %s14, %s12
  %v16 = vstv %s4
  %17 = vst [vmem:[#allocation2] sm:$0x1] %v16
  // Predicated region
  $region2: #{qrnn_forward.1} parent=0 // pred_check
    _
  $region3: #{qrnn_forward.1} parent=0 // pred_check_branch
    %19 = sbr.rel (0) target = $region5
  $region4: #{qrnn_forward.1} parent=0 // pred_region
    _
  $region5: #{qrnn_forward.1} parent=0 // pred_fallthru
    _
  // Predicated region
  $region6: #{qrnn_forward.1} parent=0 // pred_check
    _
  $region7: #{qrnn_forward.1} parent=0 // pred_check_branch
    %21 = sbr.rel (0) target = $region9
  $region8: #{qrnn_forward.1} parent=0 // pred_region
    _
  $region9: #{qrnn_forward.1} parent=0 // pred_fallthru
    _
  // Predicated region
  $region10: #{qrnn_forward.1} parent=0 // pred_check
    _
  $region11: #{qrnn_forward.1} parent=0 // pred_check_branch
    %23 = sbr.rel (0) target = $region13
  $region12: #{qrnn_forward.1} parent=0 // pred_region
    _
  $region13: #{qrnn_forward.1} parent=0 // pred_fallthru
    _
  // Predicated region
  $region14: #{qrnn_forward.1} parent=0 // pred_check
    _
  $region15: #{qrnn_forward.1} parent=0 // pred_check_branch
    %25 = sbr.rel (0) target = $region17
  $region16: #{qrnn_forward.1} parent=0 // pred_region
    _
  $region17: #{qrnn_forward.1} parent=0 // pred_fallthru
    _
  // Predicated region
  $region18: #{qrnn_forward.1} parent=0 // pred_check
    _
  $region19: #{qrnn_forward.1} parent=0 // pred_check_branch
    %27 = sbr.rel (0) target = $region21
  $region20: #{qrnn_forward.1} parent=0 // pred_region
    _
  $region21: #{qrnn_forward.1} parent=0 // pred_fallthru
    _
  // Predicated region
  $region22: #{qrnn_forward.1} parent=0 // pred_check
    _
  $region23: #{qrnn_forward.1} parent=0 // pred_check_branch
    %29 = sbr.rel (0) target = $region25
  $region24: #{qrnn_forward.1} parent=0 // pred_region
    _
  $region25: #{qrnn_forward.1} parent=0 // pred_fallthru
    _
  // Predicated region
  $region26: #{qrnn_forward.1} parent=0 // pred_check
    _
  $region27: #{qrnn_forward.1} parent=0 // pred_check_branch
    %31 = sbr.rel (0) target = $region29
  $region28: #{qrnn_forward.1} parent=0 // pred_region
    _
  $region29: #{qrnn_forward.1} parent=0 // pred_fallthru
    _
  // Predicated region
  $region30: #{qrnn_forward.1} parent=0 // pred_check
    _
  $region31: #{qrnn_forward.1} parent=0 // pred_check_branch
    %33 = sbr.rel (0) target = $region33
  $region32: #{qrnn_forward.1} parent=0 // pred_region
    _
  $region33: #{qrnn_forward.1} parent=0 // pred_fallthru
    _
  // Predicated region
  $region34: #{qrnn_forward.1} parent=0 // pred_check
    _
  $region35: #{qrnn_forward.1} parent=0 // pred_check_branch
    %35 = sbr.rel (0) target = $region37
  $region36: #{qrnn_forward.1} parent=0 // pred_region
    _
  $region37: #{qrnn_forward.1} parent=0 // pred_fallthru
    _
  // Predicated region
  $region38: #{qrnn_forward.1} parent=0 // pred_check
    _
  $region39: #{qrnn_forward.1} parent=0 // pred_check_branch
    %37 = sbr.rel (0) target = $region41
  $region40: #{qrnn_forward.1} parent=0 // pred_region
    _
  $region41: #{qrnn_forward.1} parent=0 // pred_fallthru
    _
  // Predicated region
  $region42: #{qrnn_forward.1} parent=0 // pred_check
    _
  $region43: #{qrnn_forward.1} parent=0 // pred_check_branch
    %39 = sbr.rel (0) target = $region45
  $region44: #{qrnn_forward.1} parent=0 // pred_region
    _
  $region45: #{qrnn_forward.1} parent=0 // pred_fallthru
    _
  %v40 = vld [vmem:[%s1] sm:$0xff]
  %v41 = vld [vmem:[%s1 + $0x8] sm:$0xff]
  %v42 = vld [vmem:[%s0] sm:$0xff]
  %v43 = vld [vmem:[%s0 + $0x8] sm:$0xff]
  %v44 = vld [vmem:[%s5] sm:$0xff]
  %v45 = vld [vmem:[%s5 + $0x8] sm:$0xff]
  %v46 = vld [vmem:[%s5 + $0x10] sm:$0xff]
  %v47 = vld [vmem:[%s5 + $0x18] sm:$0xff]
  %v48 = vld [vmem:[%s6] sm:$0xff]
  %v49 = vld [vmem:[%s6 + $0x8] sm:$0xff]
  %v50 = vld [vmem:[%s6 + $0x10] sm:$0xff]
  %v51 = vld [vmem:[%s6 + $0x18] sm:$0xff]
  %v52 = vld [vmem:[%s7] sm:$0x1]
  %vm53 = vcmask 130048
  %v55 = vsel %vm53, %v40, 0
  %v58 = vsel %vm53, %v41, 0
  %60 = vmatprep.subr.mxu0 0.0
  %61 = vmatpush1.msra.mxu0 %v42
  %62 = vmatprep.subr.mxu0 0.0
  %63 = vmatpush1.msra.mxu0 %v43
  %64 = vmatprep.subr.mxu0 0.0
  %65 = vmatpush1.msra.mxu0 0.0
  %66 = vmatprep.subr.mxu0 0.0
  %67 = vmatpush1.msra.mxu0 0.0
  %68 = vmatprep.subr.mxu0 0.0
  %69 = vmatpush1.msra.mxu0 0.0
  %70 = vmatprep.subr.mxu0 0.0
  %71 = vmatpush1.msra.mxu0 0.0
  %72 = vmatprep.subr.mxu0 0.0
  %73 = vmatpush1.msra.mxu0 0.0
  %74 = vmatprep.subr.mxu0 0.0
  %75 = vmatpush1.msra.mxu0 0.0
  %76 = vmatprep.subr.mxu0 0.0
  %77 = vmatpush1.msra.mxu0 0.0
  %78 = vmatprep.subr.mxu0 0.0
  %79 = vmatpush1.msra.mxu0 0.0
  %80 = vmatprep.subr.mxu0 0.0
  %81 = vmatpush1.msra.mxu0 0.0
  %82 = vmatprep.subr.mxu0 0.0
  %83 = vmatpush1.msra.mxu0 0.0
  %84 = vmatprep.subr.mxu0 0.0
  %85 = vmatpush1.msra.mxu0 0.0
  %86 = vmatprep.subr.mxu0 0.0
  %87 = vmatpush1.msra.mxu0 0.0
  %88 = vmatprep.subr.mxu0 0.0
  %89 = vmatpush1.msra.mxu0 0.0
  %90 = vmatprep.subr.mxu0 0.0
  %91 = vmatpush1.msra.mxu0 0.0
  %92 = vmatprep.subr.mxu0 0.0
  %93 = vmatpush1.msra.mxu0 0.0
  %94 = vmatprep.subr.mxu0 0.0
  %95 = vmatpush1.msra.mxu0 0.0
  %96 = vmatprep.subr.mxu0 0.0
  %97 = vmatpush1.msra.mxu0 0.0
  %98 = vmatprep.subr.mxu0 0.0
  %99 = vmatpush1.msra.mxu0 0.0
  %100 = vmatprep.subr.mxu0 0.0
  %101 = vmatpush1.msra.mxu0 0.0
  %102 = vmatprep.subr.mxu0 0.0
  %103 = vmatpush1.msra.mxu0 0.0
  %104 = vmatprep.subr.mxu0 0.0
  %105 = vmatpush1.msra.mxu0 0.0
  %106 = vmatprep.subr.mxu0 0.0
  %107 = vmatpush1.msra.mxu0 0.0
  %108 = vmatprep.subr.mxu0 0.0
  %109 = vmatpush1.msra.mxu0 0.0
  %110 = vmatprep.subr.mxu0 0.0
  %111 = vmatpush1.msra.mxu0 0.0
  %112 = vmatprep.subr.mxu0 0.0
  %113 = vmatpush1.msra.mxu0 0.0
  %114 = vmatprep.subr.mxu0 0.0
  %115 = vmatpush1.msra.mxu0 0.0
  %116 = vmatprep.subr.mxu0 0.0
  %117 = vmatpush1.msra.mxu0 0.0
  %118 = vmatprep.subr.mxu0 0.0
  %119 = vmatpush1.msra.mxu0 0.0
  %120 = vmatprep.subr.mxu0 0.0
  %121 = vmatpush1.msra.mxu0 0.0
  %122 = vmatprep.subr.mxu0 0.0
  %123 = vmatpush1.msra.mxu0 0.0
  %124 = vmatprep.mubr.f32.mxu0 0.0
  %125 = vmatmul.mubr.f32.gmra.mrb[0].mxu0 %v55
  %v126 = vpop.f32.mrb[0].mxu0
  %v127 = vadd.f32 0.0, %v126
  %v128 = vpop.f32.mrb[0].mxu0
  %129 = vmatprep.mubr.f32.mxu0 0.0
  %130 = vmatmul.mubr.f32.gmra.mrb[0].mxu0 %v58
  %v131 = vpop.f32.mrb[0].mxu0
  %v132 = vadd.f32 0.0, %v131
  %v133 = vpop.f32.mrb[0].mxu0
  %134 = vdwg.mxu0
  %vm135 = vcmask 261120
  %v137 = vsel %vm135, %v42, 0
  %v140 = vsel %vm135, %v43, 0
  %142 = vmatprep.subr.mxu0 0.0
  %143 = vmatpush1.msra.mxu0 %v48
  %144 = vmatprep.subr.mxu0 0.0
  %145 = vmatpush1.msra.mxu0 %v49
  %146 = vmatprep.subr.mxu0 0.0
  %147 = vmatpush1.msra.mxu0 %v50
  %148 = vmatprep.subr.mxu0 0.0
  %149 = vmatpush1.msra.mxu0 %v51
  %150 = vmatprep.subr.mxu0 0.0
  %151 = vmatpush1.msra.mxu0 0.0
  %152 = vmatprep.subr.mxu0 0.0
  %153 = vmatpush1.msra.mxu0 0.0
  %154 = vmatprep.subr.mxu0 0.0
  %155 = vmatpush1.msra.mxu0 0.0
  %156 = vmatprep.subr.mxu0 0.0
  %157 = vmatpush1.msra.mxu0 0.0
  %158 = vmatprep.subr.mxu0 0.0
  %159 = vmatpush1.msra.mxu0 0.0
  %160 = vmatprep.subr.mxu0 0.0
  %161 = vmatpush1.msra.mxu0 0.0
  %162 = vmatprep.subr.mxu0 0.0
  %163 = vmatpush1.msra.mxu0 0.0
  %164 = vmatprep.subr.mxu0 0.0
  %165 = vmatpush1.msra.mxu0 0.0
  %166 = vmatprep.subr.mxu0 0.0
  %167 = vmatpush1.msra.mxu0 0.0
  %168 = vmatprep.subr.mxu0 0.0
  %169 = vmatpush1.msra.mxu0 0.0
  %170 = vmatprep.subr.mxu0 0.0
  %171 = vmatpush1.msra.mxu0 0.0
  %172 = vmatprep.subr.mxu0 0.0
  %173 = vmatpush1.msra.mxu0 0.0
  %174 = vmatprep.subr.mxu0 0.0
  %175 = vmatpush1.msra.mxu0 0.0
  %176 = vmatprep.subr.mxu0 0.0
  %177 = vmatpush1.msra.mxu0 0.0
  %178 = vmatprep.subr.mxu0 0.0
  %179 = vmatpush1.msra.mxu0 0.0
  %180 = vmatprep.subr.mxu0 0.0
  %181 = vmatpush1.msra.mxu0 0.0
  %182 = vmatprep.subr.mxu0 0.0
  %183 = vmatpush1.msra.mxu0 0.0
  %184 = vmatprep.subr.mxu0 0.0
  %185 = vmatpush1.msra.mxu0 0.0
  %186 = vmatprep.subr.mxu0 0.0
  %187 = vmatpush1.msra.mxu0 0.0
  %188 = vmatprep.subr.mxu0 0.0
  %189 = vmatpush1.msra.mxu0 0.0
  %190 = vmatprep.subr.mxu0 0.0
  %191 = vmatpush1.msra.mxu0 0.0
  %192 = vmatprep.subr.mxu0 0.0
  %193 = vmatpush1.msra.mxu0 0.0
  %194 = vmatprep.subr.mxu0 0.0
  %195 = vmatpush1.msra.mxu0 0.0
  %196 = vmatprep.subr.mxu0 0.0
  %197 = vmatpush1.msra.mxu0 0.0
  %198 = vmatprep.subr.mxu0 0.0
  %199 = vmatpush1.msra.mxu0 0.0
  %200 = vmatprep.subr.mxu0 0.0
  %201 = vmatpush1.msra.mxu0 0.0
  %202 = vmatprep.subr.mxu0 0.0
  %203 = vmatpush1.msra.mxu0 0.0
  %204 = vmatprep.subr.mxu0 0.0
  %205 = vmatpush1.msra.mxu0 0.0
  %206 = vmatprep.mubr.f32.mxu0 0.0
  %207 = vmatmul.mubr.f32.gmra.mrb[0].mxu0 %v137
  %v208 = vpop.f32.mrb[0].mxu0
  %v209 = vadd.f32 0.0, %v208
  %v210 = vpop.f32.mrb[0].mxu0
  %211 = vmatprep.mubr.f32.mxu0 0.0
  %212 = vmatmul.mubr.f32.gmra.mrb[0].mxu0 %v140
  %v213 = vpop.f32.mrb[0].mxu0
  %v214 = vadd.f32 0.0, %v213
  %v215 = vpop.f32.mrb[0].mxu0
  %216 = vdwg.mxu0
  %v218 = vsel %vm135, %v127, 0
  %v221 = vsel %vm135, %v132, 0
  %223 = vmatprep.subr.mxu0 0.0
  %224 = vmatpush1.msra.mxu0 %v44
  %225 = vmatprep.subr.mxu0 0.0
  %226 = vmatpush1.msra.mxu0 %v45
  %227 = vmatprep.subr.mxu0 0.0
  %228 = vmatpush1.msra.mxu0 %v46
  %229 = vmatprep.subr.mxu0 0.0
  %230 = vmatpush1.msra.mxu0 %v47
  %231 = vmatprep.subr.mxu0 0.0
  %232 = vmatpush1.msra.mxu0 0.0
  %233 = vmatprep.subr.mxu0 0.0
  %234 = vmatpush1.msra.mxu0 0.0
  %235 = vmatprep.subr.mxu0 0.0
  %236 = vmatpush1.msra.mxu0 0.0
  %237 = vmatprep.subr.mxu0 0.0
  %238 = vmatpush1.msra.mxu0 0.0
  %239 = vmatprep.subr.mxu0 0.0
  %240 = vmatpush1.msra.mxu0 0.0
  %241 = vmatprep.subr.mxu0 0.0
  %242 = vmatpush1.msra.mxu0 0.0
  %243 = vmatprep.subr.mxu0 0.0
  %244 = vmatpush1.msra.mxu0 0.0
  %245 = vmatprep.subr.mxu0 0.0
  %246 = vmatpush1.msra.mxu0 0.0
  %247 = vmatprep.subr.mxu0 0.0
  %248 = vmatpush1.msra.mxu0 0.0
  %249 = vmatprep.subr.mxu0 0.0
  %250 = vmatpush1.msra.mxu0 0.0
  %251 = vmatprep.subr.mxu0 0.0
  %252 = vmatpush1.msra.mxu0 0.0
  %253 = vmatprep.subr.mxu0 0.0
  %254 = vmatpush1.msra.mxu0 0.0
  %255 = vmatprep.subr.mxu0 0.0
  %256 = vmatpush1.msra.mxu0 0.0
  %257 = vmatprep.subr.mxu0 0.0
  %258 = vmatpush1.msra.mxu0 0.0
  %259 = vmatprep.subr.mxu0 0.0
  %260 = vmatpush1.msra.mxu0 0.0
  %261 = vmatprep.subr.mxu0 0.0
  %262 = vmatpush1.msra.mxu0 0.0
  %263 = vmatprep.subr.mxu0 0.0
  %264 = vmatpush1.msra.mxu0 0.0
  %265 = vmatprep.subr.mxu0 0.0
  %266 = vmatpush1.msra.mxu0 0.0
  %267 = vmatprep.subr.mxu0 0.0
  %268 = vmatpush1.msra.mxu0 0.0
  %269 = vmatprep.subr.mxu0 0.0
  %270 = vmatpush1.msra.mxu0 0.0
  %271 = vmatprep.subr.mxu0 0.0
  %272 = vmatpush1.msra.mxu0 0.0
  %273 = vmatprep.subr.mxu0 0.0
  %274 = vmatpush1.msra.mxu0 0.0
  %275 = vmatprep.subr.mxu0 0.0
  %276 = vmatpush1.msra.mxu0 0.0
  %277 = vmatprep.subr.mxu0 0.0
  %278 = vmatpush1.msra.mxu0 0.0
  %279 = vmatprep.subr.mxu0 0.0
  %280 = vmatpush1.msra.mxu0 0.0
  %281 = vmatprep.subr.mxu0 0.0
  %282 = vmatpush1.msra.mxu0 0.0
  %283 = vmatprep.subr.mxu0 0.0
  %284 = vmatpush1.msra.mxu0 0.0
  %285 = vmatprep.subr.mxu0 0.0
  %286 = vmatpush1.msra.mxu0 0.0
  %287 = vmatprep.mubr.f32.mxu0 0.0
  %288 = vmatmul.mubr.f32.gmra.mrb[0].mxu0 %v218
  %v289 = vpop.f32.mrb[0].mxu0
  %v290 = vadd.f32 %v209, %v289
  %v291 = vpop.f32.mrb[0].mxu0
  %292 = vmatprep.mubr.f32.mxu0 0.0
  %293 = vmatmul.mubr.f32.gmra.mrb[0].mxu0 %v221
  %v294 = vpop.f32.mrb[0].mxu0
  %v295 = vadd.f32 %v214, %v294
  %v296 = vpop.f32.mrb[0].mxu0
  %297 = vdwg.mxu0
  %v299 = vlaneseq
  %v300 = vshrl.u32 %v299, 7
  %v301 = vsub.s32 0, %v300
  %v302 = vrot.slane %v52, %v301
  %v304 = vadd.f32 %v290, %v302
  %v305 = vadd.f32 %v295, %v302
  %v306 = vtanh.pop %v304
  %v307 = vtanh.pop %v305
  %v308 = vxor.u32 %v304, 2147483648
  %v309 = vxor.u32 %v305, 2147483648
  %v310 = vmul.f32 %v308, 1.442695
  %v311 = vpow.pop %v310
  %v312 = vmul.f32 %v309, 1.442695
  %v313 = vpow.pop %v312
  %v314 = vadd.f32 %v311, 1.0
  %v315 = vadd.f32 %v313, 1.0
  %v316 = vrcp.pop %v314
  %v317 = vmul.f32 1.0, %v316
  %v318 = vrcp.pop %v315
  %v319 = vmul.f32 1.0, %v318
  %v320 = vsub.f32 1.0, %v317
  %v321 = vsub.f32 1.0, %v319
  %324 = vrot.lane.b32.xlu0 %v306, 32
  %v325 = vpop.permute.xlu0 %324
  %326 = vrot.lane.b32.xlu0 %v307, 32
  %v327 = vpop.permute.xlu0 %326
  %v330 = vmul.f32 %v320, %v325
  %v331 = vmul.f32 %v321, %v327
  %334 = vrot.lane.b32.xlu0 %v330, 32
  %v335 = vpop.permute.xlu0 %334
  %336 = vrot.lane.b32.xlu0 %v331, 32
  %v337 = vpop.permute.xlu0 %336
  %v340 = vmul.f32 %v317, %v335
  %v341 = vmul.f32 %v319, %v337
  %v342 = vld [vmem:[%s8] sm:$0xff]
  %v343 = vld [vmem:[%s8 + $0x8] sm:$0xff]
  %v344 = vld [vmem:[%s8 + $0x10] sm:$0xff]
  %v345 = vld [vmem:[%s8 + $0x18] sm:$0xff]
  %v346 = vld [vmem:[%s9] sm:$0xff]
  %v347 = vld [vmem:[%s9 + $0x8] sm:$0xff]
  %v348 = vld [vmem:[%s9 + $0x10] sm:$0xff]
  %v349 = vld [vmem:[%s9 + $0x18] sm:$0xff]
  %v350 = vld [vmem:[%s10] sm:$0x1]
  %353 = vrot.lane.b32.xlu0 %v340, 64
  %v354 = vpop.permute.xlu0 %353
  %355 = vrot.lane.b32.xlu0 %v341, 64
  %v356 = vpop.permute.xlu0 %355
  %359 = vmatprep.subr.mxu0 0.0
  %360 = vmatpush1.msra.mxu0 %v354
  %361 = vmatprep.subr.mxu0 0.0
  %362 = vmatpush1.msra.mxu0 %v356
  %363 = vmatprep.subr.mxu0 0.0
  %364 = vmatpush1.msra.mxu0 0.0
  %365 = vmatprep.subr.mxu0 0.0
  %366 = vmatpush1.msra.mxu0 0.0
  %367 = vmatprep.subr.mxu0 0.0
  %368 = vmatpush1.msra.mxu0 0.0
  %369 = vmatprep.subr.mxu0 0.0
  %370 = vmatpush1.msra.mxu0 0.0
  %371 = vmatprep.subr.mxu0 0.0
  %372 = vmatpush1.msra.mxu0 0.0
  %373 = vmatprep.subr.mxu0 0.0
  %374 = vmatpush1.msra.mxu0 0.0
  %375 = vmatprep.subr.mxu0 0.0
  %376 = vmatpush1.msra.mxu0 0.0
  %377 = vmatprep.subr.mxu0 0.0
  %378 = vmatpush1.msra.mxu0 0.0
  %379 = vmatprep.subr.mxu0 0.0
  %380 = vmatpush1.msra.mxu0 0.0
  %381 = vmatprep.subr.mxu0 0.0
  %382 = vmatpush1.msra.mxu0 0.0
  %383 = vmatprep.subr.mxu0 0.0
  %384 = vmatpush1.msra.mxu0 0.0
  %385 = vmatprep.subr.mxu0 0.0
  %386 = vmatpush1.msra.mxu0 0.0
  %387 = vmatprep.subr.mxu0 0.0
  %388 = vmatpush1.msra.mxu0 0.0
  %389 = vmatprep.subr.mxu0 0.0
  %390 = vmatpush1.msra.mxu0 0.0
  %391 = vmatprep.subr.mxu0 0.0
  %392 = vmatpush1.msra.mxu0 0.0
  %393 = vmatprep.subr.mxu0 0.0
  %394 = vmatpush1.msra.mxu0 0.0
  %395 = vmatprep.subr.mxu0 0.0
  %396 = vmatpush1.msra.mxu0 0.0
  %397 = vmatprep.subr.mxu0 0.0
  %398 = vmatpush1.msra.mxu0 0.0
  %399 = vmatprep.subr.mxu0 0.0
  %400 = vmatpush1.msra.mxu0 0.0
  %401 = vmatprep.subr.mxu0 0.0
  %402 = vmatpush1.msra.mxu0 0.0
  %403 = vmatprep.subr.mxu0 0.0
  %404 = vmatpush1.msra.mxu0 0.0
  %405 = vmatprep.subr.mxu0 0.0
  %406 = vmatpush1.msra.mxu0 0.0
  %407 = vmatprep.subr.mxu0 0.0
  %408 = vmatpush1.msra.mxu0 0.0
  %409 = vmatprep.subr.mxu0 0.0
  %410 = vmatpush1.msra.mxu0 0.0
  %411 = vmatprep.subr.mxu0 0.0
  %412 = vmatpush1.msra.mxu0 0.0
  %413 = vmatprep.subr.mxu0 0.0
  %414 = vmatpush1.msra.mxu0 0.0
  %415 = vmatprep.subr.mxu0 0.0
  %416 = vmatpush1.msra.mxu0 0.0
  %417 = vmatprep.subr.mxu0 0.0
  %418 = vmatpush1.msra.mxu0 0.0
  %419 = vmatprep.subr.mxu0 0.0
  %420 = vmatpush1.msra.mxu0 0.0
  %421 = vmatprep.subr.mxu0 0.0
  %422 = vmatpush1.msra.mxu0 0.0
  %423 = vmatprep.mubr.f32.mxu0 0.0
  %424 = vmatmul.mubr.f32.gmra.mrb[0].mxu0 %v55
  %v425 = vpop.f32.mrb[0].mxu0
  %v426 = vadd.f32 0.0, %v425
  %v427 = vpop.f32.mrb[0].mxu0
  %428 = vmatprep.mubr.f32.mxu0 0.0
  %429 = vmatmul.mubr.f32.gmra.mrb[0].mxu0 %v58
  %v430 = vpop.f32.mrb[0].mxu0
  %v431 = vadd.f32 0.0, %v430
  %v432 = vpop.f32.mrb[0].mxu0
  %433 = vdwg.mxu0
  %v434 = vsel %vm135, %v354, 0
  %v436 = vsel %vm135, %v356, 0
  %438 = vmatprep.subr.mxu0 0.0
  %439 = vmatpush1.msra.mxu0 %v346
  %440 = vmatprep.subr.mxu0 0.0
  %441 = vmatpush1.msra.mxu0 %v347
  %442 = vmatprep.subr.mxu0 0.0
  %443 = vmatpush1.msra.mxu0 %v348
  %444 = vmatprep.subr.mxu0 0.0
  %445 = vmatpush1.msra.mxu0 %v349
  %446 = vmatprep.subr.mxu0 0.0
  %447 = vmatpush1.msra.mxu0 0.0
  %448 = vmatprep.subr.mxu0 0.0
  %449 = vmatpush1.msra.mxu0 0.0
  %450 = vmatprep.subr.mxu0 0.0
  %451 = vmatpush1.msra.mxu0 0.0
  %452 = vmatprep.subr.mxu0 0.0
  %453 = vmatpush1.msra.mxu0 0.0
  %454 = vmatprep.subr.mxu0 0.0
  %455 = vmatpush1.msra.mxu0 0.0
  %456 = vmatprep.subr.mxu0 0.0
  %457 = vmatpush1.msra.mxu0 0.0
  %458 = vmatprep.subr.mxu0 0.0
  %459 = vmatpush1.msra.mxu0 0.0
  %460 = vmatprep.subr.mxu0 0.0
  %461 = vmatpush1.msra.mxu0 0.0
  %462 = vmatprep.subr.mxu0 0.0
  %463 = vmatpush1.msra.mxu0 0.0
  %464 = vmatprep.subr.mxu0 0.0
  %465 = vmatpush1.msra.mxu0 0.0
  %466 = vmatprep.subr.mxu0 0.0
  %467 = vmatpush1.msra.mxu0 0.0
  %468 = vmatprep.subr.mxu0 0.0
  %469 = vmatpush1.msra.mxu0 0.0
  %470 = vmatprep.subr.mxu0 0.0
  %471 = vmatpush1.msra.mxu0 0.0
  %472 = vmatprep.subr.mxu0 0.0
  %473 = vmatpush1.msra.mxu0 0.0
  %474 = vmatprep.subr.mxu0 0.0
  %475 = vmatpush1.msra.mxu0 0.0
  %476 = vmatprep.subr.mxu0 0.0
  %477 = vmatpush1.msra.mxu0 0.0
  %478 = vmatprep.subr.mxu0 0.0
  %479 = vmatpush1.msra.mxu0 0.0
  %480 = vmatprep.subr.mxu0 0.0
  %481 = vmatpush1.msra.mxu0 0.0
  %482 = vmatprep.subr.mxu0 0.0
  %483 = vmatpush1.msra.mxu0 0.0
  %484 = vmatprep.subr.mxu0 0.0
  %485 = vmatpush1.msra.mxu0 0.0
  %486 = vmatprep.subr.mxu0 0.0
  %487 = vmatpush1.msra.mxu0 0.0
  %488 = vmatprep.subr.mxu0 0.0
  %489 = vmatpush1.msra.mxu0 0.0
  %490 = vmatprep.subr.mxu0 0.0
  %491 = vmatpush1.msra.mxu0 0.0
  %492 = vmatprep.subr.mxu0 0.0
  %493 = vmatpush1.msra.mxu0 0.0
  %494 = vmatprep.subr.mxu0 0.0
  %495 = vmatpush1.msra.mxu0 0.0
  %496 = vmatprep.subr.mxu0 0.0
  %497 = vmatpush1.msra.mxu0 0.0
  %498 = vmatprep.subr.mxu0 0.0
  %499 = vmatpush1.msra.mxu0 0.0
  %500 = vmatprep.subr.mxu0 0.0
  %501 = vmatpush1.msra.mxu0 0.0
  %502 = vmatprep.mubr.f32.mxu0 0.0
  %503 = vmatmul.mubr.f32.gmra.mrb[0].mxu0 %v434
  %v504 = vpop.f32.mrb[0].mxu0
  %v505 = vadd.f32 0.0, %v504
  %v506 = vpop.f32.mrb[0].mxu0
  %507 = vmatprep.mubr.f32.mxu0 0.0
  %508 = vmatmul.mubr.f32.gmra.mrb[0].mxu0 %v436
  %v509 = vpop.f32.mrb[0].mxu0
  %v510 = vadd.f32 0.0, %v509
  %v511 = vpop.f32.mrb[0].mxu0
  %512 = vdwg.mxu0
  %v514 = vsel %vm135, %v426, 0
  %v517 = vsel %vm135, %v431, 0
  %519 = vmatprep.subr.mxu0 0.0
  %520 = vmatpush1.msra.mxu0 %v342
  %521 = vmatprep.subr.mxu0 0.0
  %522 = vmatpush1.msra.mxu0 %v343
  %523 = vmatprep.subr.mxu0 0.0
  %524 = vmatpush1.msra.mxu0 %v344
  %525 = vmatprep.subr.mxu0 0.0
  %526 = vmatpush1.msra.mxu0 %v345
  %527 = vmatprep.subr.mxu0 0.0
  %528 = vmatpush1.msra.mxu0 0.0
  %529 = vmatprep.subr.mxu0 0.0
  %530 = vmatpush1.msra.mxu0 0.0
  %531 = vmatprep.subr.mxu0 0.0
  %532 = vmatpush1.msra.mxu0 0.0
  %533 = vmatprep.subr.mxu0 0.0
  %534 = vmatpush1.msra.mxu0 0.0
  %535 = vmatprep.subr.mxu0 0.0
  %536 = vmatpush1.msra.mxu0 0.0
  %537 = vmatprep.subr.mxu0 0.0
  %538 = vmatpush1.msra.mxu0 0.0
  %539 = vmatprep.subr.mxu0 0.0
  %540 = vmatpush1.msra.mxu0 0.0
  %541 = vmatprep.subr.mxu0 0.0
  %542 = vmatpush1.msra.mxu0 0.0
  %543 = vmatprep.subr.mxu0 0.0
  %544 = vmatpush1.msra.mxu0 0.0
  %545 = vmatprep.subr.mxu0 0.0
  %546 = vmatpush1.msra.mxu0 0.0
  %547 = vmatprep.subr.mxu0 0.0
  %548 = vmatpush1.msra.mxu0 0.0
  %549 = vmatprep.subr.mxu0 0.0
  %550 = vmatpush1.msra.mxu0 0.0
  %551 = vmatprep.subr.mxu0 0.0
  %552 = vmatpush1.msra.mxu0 0.0
  %553 = vmatprep.subr.mxu0 0.0
  %554 = vmatpush1.msra.mxu0 0.0
  %555 = vmatprep.subr.mxu0 0.0
  %556 = vmatpush1.msra.mxu0 0.0
  %557 = vmatprep.subr.mxu0 0.0
  %558 = vmatpush1.msra.mxu0 0.0
  %559 = vmatprep.subr.mxu0 0.0
  %560 = vmatpush1.msra.mxu0 0.0
  %561 = vmatprep.subr.mxu0 0.0
  %562 = vmatpush1.msra.mxu0 0.0
  %563 = vmatprep.subr.mxu0 0.0
  %564 = vmatpush1.msra.mxu0 0.0
  %565 = vmatprep.subr.mxu0 0.0
  %566 = vmatpush1.msra.mxu0 0.0
  %567 = vmatprep.subr.mxu0 0.0
  %568 = vmatpush1.msra.mxu0 0.0
  %569 = vmatprep.subr.mxu0 0.0
  %570 = vmatpush1.msra.mxu0 0.0
  %571 = vmatprep.subr.mxu0 0.0
  %572 = vmatpush1.msra.mxu0 0.0
  %573 = vmatprep.subr.mxu0 0.0
  %574 = vmatpush1.msra.mxu0 0.0
  %575 = vmatprep.subr.mxu0 0.0
  %576 = vmatpush1.msra.mxu0 0.0
  %577 = vmatprep.subr.mxu0 0.0
  %578 = vmatpush1.msra.mxu0 0.0
  %579 = vmatprep.subr.mxu0 0.0
  %580 = vmatpush1.msra.mxu0 0.0
  %581 = vmatprep.subr.mxu0 0.0
  %582 = vmatpush1.msra.mxu0 0.0
  %583 = vmatprep.mubr.f32.mxu0 0.0
  %584 = vmatmul.mubr.f32.gmra.mrb[0].mxu0 %v514
  %v585 = vpop.f32.mrb[0].mxu0
  %v586 = vadd.f32 %v505, %v585
  %v587 = vpop.f32.mrb[0].mxu0
  %588 = vmatprep.mubr.f32.mxu0 0.0
  %589 = vmatmul.mubr.f32.gmra.mrb[0].mxu0 %v517
  %v590 = vpop.f32.mrb[0].mxu0
  %v591 = vadd.f32 %v510, %v590
  %v592 = vpop.f32.mrb[0].mxu0
  %593 = vdwg.mxu0
  %v595 = vlaneseq
  %v596 = vshrl.u32 %v595, 7
  %v597 = vsub.s32 0, %v596
  %v598 = vrot.slane %v350, %v597
  %v600 = vadd.f32 %v586, %v598
  %v601 = vadd.f32 %v591, %v598
  %v602 = vtanh.pop %v600
  %v603 = vtanh.pop %v601
  %v604 = vxor.u32 %v600, 2147483648
  %v605 = vxor.u32 %v601, 2147483648
  %v606 = vmul.f32 %v604, 1.442695
  %v607 = vpow.pop %v606
  %v608 = vmul.f32 %v605, 1.442695
  %v609 = vpow.pop %v608
  %v610 = vadd.f32 %v607, 1.0
  %v611 = vadd.f32 %v609, 1.0
  %v612 = vrcp.pop %v610
  %v613 = vmul.f32 1.0, %v612
  %v614 = vrcp.pop %v611
  %v615 = vmul.f32 1.0, %v614
  %v616 = vsub.f32 1.0, %v613
  %v617 = vsub.f32 1.0, %v615
  %v618 = vmul.f32 %v613, %v330
  %v619 = vmul.f32 %v615, %v331
  %622 = vrot.lane.b32.xlu0 %v602, 32
  %v623 = vpop.permute.xlu0 %622
  %624 = vrot.lane.b32.xlu0 %v603, 32
  %v625 = vpop.permute.xlu0 %624
  %v628 = vmul.f32 %v616, %v623
  %v629 = vmul.f32 %v617, %v625
  %v630 = vadd.f32 %v618, %v628
  %v631 = vadd.f32 %v619, %v629
  %634 = vrot.lane.b32.xlu0 %v630, 32
  %v635 = vpop.permute.xlu0 %634
  %636 = vrot.lane.b32.xlu0 %v631, 32
  %v637 = vpop.permute.xlu0 %636
  %v640 = vmul.f32 %v613, %v635
  %v641 = vmul.f32 %v615, %v637
  %v642 = vld [vmem:[%s3] sm:$0xff]
  %v643 = vld [vmem:[%s3 + $0x8] sm:$0xff]
  %646 = vrot.lane.b32.xlu0 %v642, 64
  %v647 = vpop.permute.xlu0 %646
  %648 = vrot.lane.b32.xlu0 %v643, 64
  %v649 = vpop.permute.xlu0 %648
  %v652 = vmul.f32 %v640, %v647
  %v653 = vmul.f32 %v641, %v649
  %v654 = vld [vmem:[%s2] sm:$0x3]
  %657 = vrot.lane.b32.xlu0 %v652, 64
  %v658 = vpop.permute.xlu0 %657
  %659 = vrot.lane.b32.xlu0 %v653, 64
  %v660 = vpop.permute.xlu0 %659
  %v664 = vsel %vm53, %v654, 0
  %666 = vmatprep.subr.mxu0 0.0
  %667 = vmatpush1.msra.mxu0 %v658
  %668 = vmatprep.subr.mxu0 0.0
  %669 = vmatpush1.msra.mxu0 %v660
  %670 = vmatprep.subr.mxu0 0.0
  %671 = vmatpush1.msra.mxu0 0.0
  %672 = vmatprep.subr.mxu0 0.0
  %673 = vmatpush1.msra.mxu0 0.0
  %674 = vmatprep.subr.mxu0 0.0
  %675 = vmatpush1.msra.mxu0 0.0
  %676 = vmatprep.subr.mxu0 0.0
  %677 = vmatpush1.msra.mxu0 0.0
  %678 = vmatprep.subr.mxu0 0.0
  %679 = vmatpush1.msra.mxu0 0.0
  %680 = vmatprep.subr.mxu0 0.0
  %681 = vmatpush1.msra.mxu0 0.0
  %682 = vmatprep.subr.mxu0 0.0
  %683 = vmatpush1.msra.mxu0 0.0
  %684 = vmatprep.subr.mxu0 0.0
  %685 = vmatpush1.msra.mxu0 0.0
  %686 = vmatprep.subr.mxu0 0.0
  %687 = vmatpush1.msra.mxu0 0.0
  %688 = vmatprep.subr.mxu0 0.0
  %689 = vmatpush1.msra.mxu0 0.0
  %690 = vmatprep.subr.mxu0 0.0
  %691 = vmatpush1.msra.mxu0 0.0
  %692 = vmatprep.subr.mxu0 0.0
  %693 = vmatpush1.msra.mxu0 0.0
  %694 = vmatprep.subr.mxu0 0.0
  %695 = vmatpush1.msra.mxu0 0.0
  %696 = vmatprep.subr.mxu0 0.0
  %697 = vmatpush1.msra.mxu0 0.0
  %698 = vmatprep.subr.mxu0 0.0
  %699 = vmatpush1.msra.mxu0 0.0
  %700 = vmatprep.subr.mxu0 0.0
  %701 = vmatpush1.msra.mxu0 0.0
  %702 = vmatprep.subr.mxu0 0.0
  %703 = vmatpush1.msra.mxu0 0.0
  %704 = vmatprep.subr.mxu0 0.0
  %705 = vmatpush1.msra.mxu0 0.0
  %706 = vmatprep.subr.mxu0 0.0
  %707 = vmatpush1.msra.mxu0 0.0
  %708 = vmatprep.subr.mxu0 0.0
  %709 = vmatpush1.msra.mxu0 0.0
  %710 = vmatprep.subr.mxu0 0.0
  %711 = vmatpush1.msra.mxu0 0.0
  %712 = vmatprep.subr.mxu0 0.0
  %713 = vmatpush1.msra.mxu0 0.0
  %714 = vmatprep.subr.mxu0 0.0
  %715 = vmatpush1.msra.mxu0 0.0
  %716 = vmatprep.subr.mxu0 0.0
  %717 = vmatpush1.msra.mxu0 0.0
  %718 = vmatprep.subr.mxu0 0.0
  %719 = vmatpush1.msra.mxu0 0.0
  %720 = vmatprep.subr.mxu0 0.0
  %721 = vmatpush1.msra.mxu0 0.0
  %722 = vmatprep.subr.mxu0 0.0
  %723 = vmatpush1.msra.mxu0 0.0
  %724 = vmatprep.subr.mxu0 0.0
  %725 = vmatpush1.msra.mxu0 0.0
  %726 = vmatprep.subr.mxu0 0.0
  %727 = vmatpush1.msra.mxu0 0.0
  %728 = vmatprep.subr.mxu0 0.0
  %729 = vmatpush1.msra.mxu0 0.0
  %730 = vmatprep.mubr.f32.mxu0 0.0
  %731 = vmatmul.mubr.f32.gmra.mrb[0].mxu0 %v664
  %v732 = vpop.f32.mrb[0].mxu0
  %v733 = vadd.f32 0.0, %v732
  %v734 = vpop.f32.mrb[0].mxu0
  %735 = vdwg.mxu0
  %vm736 = vcmask 254976
  %v737 = vsel %vm736, %v733, 0.0
  %738 = vadd.xlane.f32.xlu0 %v737
  %v739 = vpop.xlane.xlu0 %738
  %v740 = vld [vmem:[#allocation2] sm:$0x1]
  %v742 = vlaneseq
  %v743 = vshrl.u32 %v742, 7
  %v744 = vsub.s32 0, %v743
  %v745 = vrot.slane %v740, %v744
  %v747 = vadd.f32 %v739, %v745
  %v748 = vxor.u32 %v747, 2147483648
  %v749 = vmul.f32 %v748, 1.442695
  %v750 = vpow.pop %v749
  %v751 = vadd.f32 %v750, 1.0
  %v752 = vrcp.pop %v751
  %v753 = vmul.f32 1.0, %v752
  %vm754 = vcmask 1024
  %755 = vst.msk [vmem:[%s11] sm:$0x3] %vm754, %v753
  // Predicated region
  $region46: #{qrnn_forward.1} parent=0 // pred_check
    _
  $region47: #{qrnn_forward.1} parent=0 // pred_check_branch
    %757 = sbr.rel (0) target = $region49
  $region48: #{qrnn_forward.1} parent=0 // pred_region
    _
  $region49: #{qrnn_forward.1} parent=0 // pred_fallthru
    _
  // Predicated region
  $region50: #{qrnn_forward.1} parent=0 // pred_check
    _
  $region51: #{qrnn_forward.1} parent=0 // pred_check_branch
    %759 = sbr.rel (0) target = $region53
  $region52: #{qrnn_forward.1} parent=0 // pred_region
    _
  $region53: #{qrnn_forward.1} parent=0 // pred_fallthru
    _

</llo_original>
